<compile_context>
chip_gen: v5e
topology: v5e:2x2
jax: 0.10.0
libtpu: 0.0.40
codegen_flags: <defaults>
</compile_context>

<pallas_src>
import jax
import jax.numpy as jnp
from jax.experimental import pallas as pl
from jax.experimental.pallas import tpu as pltpu

HIDDEN = 100   # torch module hidden width
H_PAD = 128    # lane-aligned padded hidden width


def _make_mlp_kernel(out_dim: int):
    def mlp_kernel(x_ref, w1_ref, b_ref, w2_ref, w3_ref, out_ref):
        x = x_ref[...]          # (TILE_B, K) f32
        b = b_ref[...]          # (3, H_PAD)  f32  (rows: b1, b2, b3)

        # ---- Layer 1: small-K matmul on the (otherwise idle) MXU ----
        h1 = jnp.dot(x, w1_ref[...], preferred_element_type=jnp.float32) + b[0:1, :]
        h1 = jnp.maximum(h1, 0.0)

        # ---- Layer 2: bf16 MXU operands, f32 accumulation; VPU math in f32 ----
        h2 = jnp.dot(h1.astype(jnp.bfloat16), w2_ref[...],
                     preferred_element_type=jnp.float32)
        h2 = jnp.maximum(h2 + b[1:2, :], 0.0)

        # ---- Output layer: full 128-wide MXU matmul, narrow store ----
        # Only the first out_dim lanes are written back (masked vst), cutting HBM
        # writeback by up to 64x vs the old f32 128-lane slab.
        y = jnp.dot(h2.astype(jnp.bfloat16), w3_ref[...],
                    preferred_element_type=jnp.float32) + b[2:3, :]
        out_ref[...] = y[:, :out_dim].astype(out_ref.dtype)

    return mlp_kernel


def _choose_tiling(B: int, tile_b: int):
    """Pick (tile_rows, n_steps, padded_batch).

    - tile rows are a multiple of 8 (sublane).
    - at least 2 (even) grid steps when B >= 16 so the "parallel" axis shards
      across both v7x TensorCores.
    - padding overshoot is < 8 * n_steps rows (vs. up to a full tile before).
    """
    b8 = 8 * pl.cdiv(B, 8)
    n_min = 2 if b8 >= 16 else 1
    n = max(n_min, pl.cdiv(b8, tile_b))
    if b8 >= 16 and n % 2 == 1:
        n += 1                                   # even split across 2 TCs (v7x)
    tile = 8 * pl.cdiv(pl.cdiv(b8, n), 8)        # per-step rows, multiple of 8
    b_pad = n * tile
    return tile, n, b_pad


def network_forward(x, packed, *, tile_b=2048):
    """x: (B, input_dim) float32. packed: output of pack_params()."""
    w1, b, w2, w3 = packed["w1"], packed["b"], packed["w2"], packed["w3"]
    out_dim = packed["out_dim"]
    K, H = w1.shape
    B = x.shape[0]

    # tile_b=2048 keeps per-step VMEM (~10 MiB incl. double buffers and spilled
    # intermediates) well under v7x's 32 MiB scoped default; sweep up to 4096
    # with vmem_limit_bytes if profiling shows exposed step overhead.
    tile, n_steps, b_pad = _choose_tiling(B, tile_b)
    if b_pad != B:
        x = jnp.pad(x, ((0, b_pad - B), (0, 0)))

    flops = 2 * b_pad * (K * H + H * H + H * H)
    bytes_accessed = (b_pad * K * 4 + b_pad * out_dim * 4      # activations in/out
                      + K * H * 4 + 3 * H * 4 + 2 * H * H * 2)  # weights + biases

    out = pl.pallas_call(
        _make_mlp_kernel(out_dim),
        out_shape=jax.ShapeDtypeStruct((b_pad, out_dim), jnp.float32),
        grid=(n_steps,),
        in_specs=[
            pl.BlockSpec((tile, K), lambda i: (i, 0)),   # x: batch-tiled
            pl.BlockSpec((K, H), lambda i: (0, 0)),      # w1: resident across grid
            pl.BlockSpec((3, H), lambda i: (0, 0)),      # fused biases (b1,b2,b3)
            pl.BlockSpec((H, H), lambda i: (0, 0)),      # w2 (bf16)
            pl.BlockSpec((H, H), lambda i: (0, 0)),      # w3 (bf16, out cols padded)
        ],
        out_specs=pl.BlockSpec((tile, out_dim), lambda i: (i, 0)),  # narrow output
        compiler_params=pltpu.CompilerParams(
            dimension_semantics=("parallel",)),          # shard batch across TCs
        cost_estimate=pl.CostEstimate(
            flops=flops, transcendentals=0, bytes_accessed=bytes_accessed),
    )(x, w1, b, w2, w3)

    # Only a row slice, and only when batch padding was actually added.
    return out if b_pad == B else out[:B]


def init_params(key, input_dimension, output_dimension, hidden=HIDDEN):
    """Deterministic init mimicking torch.nn.Linear's U(-1/sqrt(fan_in), +1/sqrt(fan_in))."""
    ks = jax.random.split(key, 6)

    def linear(kw, kb, fan_in, fan_out):
        bound = 1.0 / jnp.sqrt(fan_in)
        w = jax.random.uniform(kw, (fan_in, fan_out), jnp.float32, -bound, bound)
        b = jax.random.uniform(kb, (1, fan_out), jnp.float32, -bound, bound)
        return w, b

    w1, b1 = linear(ks[0], ks[1], input_dimension, hidden)
    w2, b2 = linear(ks[2], ks[3], hidden, hidden)
    w3, b3 = linear(ks[4], ks[5], hidden, output_dimension)
    return {"w1": w1, "b1": b1, "w2": w2, "b2": b2, "w3": w3, "b3": b3}


def pack_params(p, h_pad=H_PAD):
    """One-time repack: pad hidden to 128 lanes, bf16 MXU weights, fused biases.

    Zero padding is mathematically inert (ReLU(0 + 0) = 0 in padded columns),
    and the padded w3 columns are never stored (narrow out_dim writeback).
    """
    in_dim, hid = p["w1"].shape
    out_dim = p["w3"].shape[1]
    assert out_dim <= h_pad, "output head wider than padded hidden not supported"

    w1 = jnp.zeros((in_dim, h_pad), jnp.float32).at[:, :hid].set(p["w1"])
    w2 = (jnp.zeros((h_pad, h_pad), jnp.float32)
          .at[:hid, :hid].set(p["w2"]).astype(jnp.bfloat16))
    w3 = (jnp.zeros((h_pad, h_pad), jnp.float32)
          .at[:hid, :out_dim].set(p["w3"]).astype(jnp.bfloat16))
    b = jnp.zeros((3, h_pad), jnp.float32)
    b = b.at[0, :hid].set(p["b1"][0])
    b = b.at[1, :hid].set(p["b2"][0])
    b = b.at[2, :out_dim].set(p["b3"][0])
    return {"w1": w1, "b": b, "w2": w2, "w3": w3, "out_dim": out_dim}


def network_forward_ref(x, p):
    h1 = jnp.maximum(x @ p["w1"] + p["b1"], 0.0)
    h2 = jnp.maximum(h1 @ p["w2"] + p["b2"], 0.0)
    return h2 @ p["w3"] + p["b3"]


if __name__ == "__main__":
    key = jax.random.PRNGKey(0)
    k_param, k_x = jax.random.split(key)

    input_dimension = 4
    output_dimension = 2
    batch = 8

    params = init_params(k_param, input_dimension, output_dimension)
    packed = pack_params(params)
    x = jax.random.normal(k_x, (batch, input_dimension), jnp.float32)

    out = network_forward(x, packed)
    out = jax.block_until_ready(out)

    ref = network_forward_ref(x, params)
    assert out.shape == (batch, output_dimension)
    # Layers 2/3 use bf16 MXU operands (f32 accumulation) -> bf16-level tolerance.
    assert jnp.allclose(out, ref, atol=3e-2, rtol=3e-2), (
        f"max abs err {jnp.max(jnp.abs(out - ref))}")

    print("KERNEL_OK")
</pallas_src>

<mosaic_0001>
module attributes {stable_mosaic.version = 11 : i64} {
  func.func @mlp_kernel(%arg0: i32, %arg1: memref<8x4xf32, #tpu.memory_space<vmem>>, %arg2: memref<4x128xf32, #tpu.memory_space<vmem>>, %arg3: memref<3x128xf32, #tpu.memory_space<vmem>>, %arg4: memref<128x128xbf16, #tpu.memory_space<vmem>>, %arg5: memref<128x128xbf16, #tpu.memory_space<vmem>>, %arg6: memref<8x2xf32, #tpu.memory_space<vmem>>) attributes {dimension_semantics = [#tpu.dimension_semantics<parallel>], iteration_bounds = array<i64: 1>, scalar_prefetch = 0 : i64, scratch_operands = 0 : i64, tpu.core_type = #tpu.core_type<tc>, window_params = [{transform_indices = @transform_0, window_bounds = array<i64: 8, 4>}, {pipeline_mode = #tpu.pipeline_mode<synchronous>, transform_indices = @transform_1, window_bounds = array<i64: 4, 128>}, {pipeline_mode = #tpu.pipeline_mode<synchronous>, transform_indices = @transform_2, window_bounds = array<i64: 3, 128>}, {pipeline_mode = #tpu.pipeline_mode<synchronous>, transform_indices = @transform_3, window_bounds = array<i64: 128, 128>}, {pipeline_mode = #tpu.pipeline_mode<synchronous>, transform_indices = @transform_4, window_bounds = array<i64: 128, 128>}, {transform_indices = @transform_5, window_bounds = array<i64: 8, 2>}]} {
    %c0 = arith.constant 0 : index
    %c0_0 = arith.constant 0 : index
    %0 = vector.load %arg1[%c0, %c0_0] : memref<8x4xf32, #tpu.memory_space<vmem>>, vector<8x4xf32>
    %c0_1 = arith.constant 0 : index
    %c0_2 = arith.constant 0 : index
    %1 = vector.load %arg3[%c0_1, %c0_2] : memref<3x128xf32, #tpu.memory_space<vmem>>, vector<3x128xf32>
    %c0_3 = arith.constant 0 : index
    %c0_4 = arith.constant 0 : index
    %2 = vector.load %arg2[%c0_3, %c0_4] : memref<4x128xf32, #tpu.memory_space<vmem>>, vector<4x128xf32>
    %cst = arith.constant dense<0.000000e+00> : vector<8x128xf32>
    %3 = tpu.matmul %0, %2, %cst {dimension_numbers = #tpu.dot_dimension_numbers<[1], [0], [0], [1], [0, 0, 1, 1], [], []>} : vector<8x4xf32>, vector<4x128xf32>, vector<8x128xf32> -> vector<8x128xf32>
    %4 = vector.extract_strided_slice %1 {offsets = [0, 0], sizes = [1, 128], strides = [1, 1]} : vector<3x128xf32> to vector<1x128xf32>
    %5 = vector.broadcast %4 : vector<1x128xf32> to vector<8x128xf32>
    %6 = arith.addf %3, %5 : vector<8x128xf32>
    %cst_5 = arith.constant 0.000000e+00 : f32
    %7 = vector.broadcast %cst_5 : f32 to vector<8x128xf32>
    %8 = arith.maximumf %6, %7 : vector<8x128xf32>
    %9 = arith.truncf %8 : vector<8x128xf32> to vector<8x128xbf16>
    %c0_6 = arith.constant 0 : index
    %c0_7 = arith.constant 0 : index
    %10 = vector.load %arg4[%c0_6, %c0_7] : memref<128x128xbf16, #tpu.memory_space<vmem>>, vector<128x128xbf16>
    %cst_8 = arith.constant dense<0.000000e+00> : vector<8x128xf32>
    %11 = tpu.matmul %9, %10, %cst_8 {dimension_numbers = #tpu.dot_dimension_numbers<[1], [0], [0], [1], [0, 0, 1, 1], [], []>} : vector<8x128xbf16>, vector<128x128xbf16>, vector<8x128xf32> -> vector<8x128xf32>
    %12 = vector.extract_strided_slice %1 {offsets = [1, 0], sizes = [1, 128], strides = [1, 1]} : vector<3x128xf32> to vector<1x128xf32>
    %13 = vector.broadcast %12 : vector<1x128xf32> to vector<8x128xf32>
    %14 = arith.addf %11, %13 : vector<8x128xf32>
    %cst_9 = arith.constant 0.000000e+00 : f32
    %15 = vector.broadcast %cst_9 : f32 to vector<8x128xf32>
    %16 = arith.maximumf %14, %15 : vector<8x128xf32>
    %17 = arith.truncf %16 : vector<8x128xf32> to vector<8x128xbf16>
    %c0_10 = arith.constant 0 : index
    %c0_11 = arith.constant 0 : index
    %18 = vector.load %arg5[%c0_10, %c0_11] : memref<128x128xbf16, #tpu.memory_space<vmem>>, vector<128x128xbf16>
    %cst_12 = arith.constant dense<0.000000e+00> : vector<8x128xf32>
    %19 = tpu.matmul %17, %18, %cst_12 {dimension_numbers = #tpu.dot_dimension_numbers<[1], [0], [0], [1], [0, 0, 1, 1], [], []>} : vector<8x128xbf16>, vector<128x128xbf16>, vector<8x128xf32> -> vector<8x128xf32>
    %20 = vector.extract_strided_slice %1 {offsets = [2, 0], sizes = [1, 128], strides = [1, 1]} : vector<3x128xf32> to vector<1x128xf32>
    %21 = vector.broadcast %20 : vector<1x128xf32> to vector<8x128xf32>
    %22 = arith.addf %19, %21 : vector<8x128xf32>
    %23 = vector.extract_strided_slice %22 {offsets = [0, 0], sizes = [8, 2], strides = [1, 1]} : vector<8x128xf32> to vector<8x2xf32>
    %c0_13 = arith.constant 0 : index
    %c0_14 = arith.constant 0 : index
    %24 = vector.load %arg6[%c0_13, %c0_14] : memref<8x2xf32, #tpu.memory_space<vmem>>, vector<8x2xf32>
    tpu.vector_store %arg6[%c0_13, %c0_14], %23 {strides = array<i32>} : memref<8x2xf32, #tpu.memory_space<vmem>>, vector<8x2xf32>,
    return
  }
  func.func @transform_0(%arg0: i32) -> (i32, i32) {
    %c0_i32 = arith.constant 0 : i32
    %c0_i32_0 = arith.constant 0 : i32
    return %arg0, %c0_i32 : i32, i32
  }
  func.func @transform_1(%arg0: i32) -> (i32, i32) {
    %c0_i32 = arith.constant 0 : i32
    %c0_i32_0 = arith.constant 0 : i32
    %c0_i32_1 = arith.constant 0 : i32
    return %c0_i32, %c0_i32_0 : i32, i32
  }
  func.func @transform_2(%arg0: i32) -> (i32, i32) {
    %c0_i32 = arith.constant 0 : i32
    %c0_i32_0 = arith.constant 0 : i32
    %c0_i32_1 = arith.constant 0 : i32
    return %c0_i32, %c0_i32_0 : i32, i32
  }
  func.func @transform_3(%arg0: i32) -> (i32, i32) {
    %c0_i32 = arith.constant 0 : i32
    %c0_i32_0 = arith.constant 0 : i32
    %c0_i32_1 = arith.constant 0 : i32
    return %c0_i32, %c0_i32_0 : i32, i32
  }
  func.func @transform_4(%arg0: i32) -> (i32, i32) {
    %c0_i32 = arith.constant 0 : i32
    %c0_i32_0 = arith.constant 0 : i32
    %c0_i32_1 = arith.constant 0 : i32
    return %c0_i32, %c0_i32_0 : i32, i32
  }
  func.func @transform_5(%arg0: i32) -> (i32, i32) {
    %c0_i32 = arith.constant 0 : i32
    %c0_i32_0 = arith.constant 0 : i32
    return %arg0, %c0_i32 : i32, i32
  }
}

</mosaic_0001>

<llo_original>
// kernel: tpu_custom_call.1
$region0: #{tpu_custom_call.1}
  #allocation0 [shape = 'u32[]', space=smem, size = 0x4, offset = 0x4, fixed_abs, tag = 'smem constant byte address 0x4 - core index']
  #allocation1 [shape = 'u32[72,128]{1,0:T(1,128)}', space=vmem, size = 0x9000, scoped, tag = 'internal scratch']
  %s0 = inlined_call_operand.vmem [shape: f32[8,4], index: 0, kind: input, shape index: {}]
  %s1 = inlined_call_operand.vmem [shape: f32[4,128], index: 1, kind: input, shape index: {}]
  %s2 = inlined_call_operand.vmem [shape: f32[3,128], index: 2, kind: input, shape index: {}]
  %s3 = inlined_call_operand.hbm [shape: bf16[128,128], index: 3, kind: input, shape index: {}]
  %s4 = inlined_call_operand.hbm [shape: bf16[128,128], index: 4, kind: input, shape index: {}]
  %s5 = inlined_call_operand.vmem [shape: f32[8,2], index: 5, kind: output, shape index: {}]
  %s6 = sld [smem:[#allocation0]]
  $region38: #{tpu_custom_call.1} parent=0
    _
  %s8 = ssub.s32 1, %s6
  %s9 = scalar_select 0, %s8, %s6
  $region1: #{tpu_custom_call.1} parent=0
    #allocation2 [shape = 'u8[32768]{0}', space=vmem, size = 0x8000, scoped, tag = 'input window, operand 3, single buffered']
    #allocation3 [shape = 's32[1]{0}', space=sflag, size = 0x4, scoped, tag = 'scoped memory for tpu_custom_call.1']
    #allocation4 [shape = 'u8[32768]{0}', space=vmem, size = 0x8000, scoped, tag = 'input window, operand 4, single buffered']
    #allocation5 [shape = 's32[1]{0}', space=sflag, size = 0x4, scoped, tag = 'scoped memory for tpu_custom_call.1']
    %10 = vsyncpa [#allocation3], 0
    %11 = vsyncpa [#allocation5], 0
    // Predicated region
    $region2: #{tpu_custom_call.1} parent=1 // pred_check
      _
    $region3: #{tpu_custom_call.1} parent=1 // pred_check_branch
      %13 = sbr.rel (0) target = $region5
    $region4: #{tpu_custom_call.1} parent=1 // pred_region
      _
    $region5: #{tpu_custom_call.1} parent=1 // pred_fallthru
      _
    // Predicated region
    $region6: #{tpu_custom_call.1} parent=1 // pred_check
      _
    $region7: #{tpu_custom_call.1} parent=1 // pred_check_branch
      %15 = sbr.rel (0) target = $region9
    $region8: #{tpu_custom_call.1} parent=1 // pred_region
      _
    $region9: #{tpu_custom_call.1} parent=1 // pred_fallthru
      _
    // Predicated region
    $region10: #{tpu_custom_call.1} parent=1 // pred_check
      _
    $region11: #{tpu_custom_call.1} parent=1 // pred_check_branch
      %17 = sbr.rel (0) target = $region13
    $region12: #{tpu_custom_call.1} parent=1 // pred_region
      _
    $region13: #{tpu_custom_call.1} parent=1 // pred_fallthru
      _
    // Predicated region
    $region14: #{tpu_custom_call.1} parent=1 // pred_check
      _
    $region15: #{tpu_custom_call.1} parent=1 // pred_check_branch
      %19 = sbr.rel (0) target = $region17
    $region16: #{tpu_custom_call.1} parent=1 // pred_region
      %21 = vsyncadd [#allocation3], 0
      %s22 = sshll.u32 %s3, 4
      %s23 = int_to_ptr.hbm [resolvable:$true] %s22
      %s24 = sshll.u32 [#allocation2], 4
      %s25 = int_to_ptr.vmem [resolvable:$true] %s24
      %30 = dma.hbm_to_vmem [thread:$0]  %s23, 1024, %s25, [#allocation3], 64, 64, 4
    $region17: #{tpu_custom_call.1} parent=1 // pred_fallthru
      _
    // Predicated region
    $region18: #{tpu_custom_call.1} parent=1 // pred_check
      _
    $region19: #{tpu_custom_call.1} parent=1 // pred_check_branch
      %32 = sbr.rel (0) target = $region21
    $region20: #{tpu_custom_call.1} parent=1 // pred_region
      %34 = vsyncadd [#allocation5], 0
      %s35 = sshll.u32 %s4, 4
      %s36 = int_to_ptr.hbm [resolvable:$true] %s35
      %s37 = sshll.u32 [#allocation4], 4
      %s38 = int_to_ptr.vmem [resolvable:$true] %s37
      %43 = dma.hbm_to_vmem [thread:$0]  %s36, 1024, %s38, [#allocation5], 64, 64, 4
    $region21: #{tpu_custom_call.1} parent=1 // pred_fallthru
      _
    // Predicated region
    $region22: #{tpu_custom_call.1} parent=1 // pred_check
      _
    $region23: #{tpu_custom_call.1} parent=1 // pred_check_branch
      %45 = sbr.rel (0) target = $region25
    $region24: #{tpu_custom_call.1} parent=1 // pred_region
      %47 = dma.done [#allocation3], 1024
    $region25: #{tpu_custom_call.1} parent=1 // pred_fallthru
      _
    // Predicated region
    $region26: #{tpu_custom_call.1} parent=1 // pred_check
      _
    $region27: #{tpu_custom_call.1} parent=1 // pred_check_branch
      %49 = sbr.rel (0) target = $region29
    $region28: #{tpu_custom_call.1} parent=1 // pred_region
      %51 = dma.done [#allocation5], 1024
    $region29: #{tpu_custom_call.1} parent=1 // pred_fallthru
      _
    %v52 = vld [vmem:[%s0] sm:$0xff]
    %v53 = vld [vmem:[%s2] sm:$0x7]
    %v54 = vld [vmem:[%s1] sm:$0xf]
    %v55 = vperm.slane %v53, 0
    %vm56 = vcmask 31744
    %v58 = vsel %vm56, %v52, 0
    %vm60 = vcmask 1043456
    %v62 = vsel %vm60, %v54, 0
    %64 = vmatpush.msra.mxu0 0.0
    %65 = vmatpush.msra.mxu0 0.0
    %66 = vmatpush.msra.mxu0 0.0
    %67 = vmatpush.msra.mxu0 0.0
    %68 = vmatpush.msra.mxu0 0.0
    %69 = vmatpush.msra.mxu0 0.0
    %70 = vmatpush.msra.mxu0 0.0
    %71 = vmatpush.msra.mxu0 0.0
    %72 = vmatpush.msra.mxu0 0.0
    %73 = vmatpush.msra.mxu0 0.0
    %74 = vmatpush.msra.mxu0 0.0
    %75 = vmatpush.msra.mxu0 0.0
    %76 = vmatpush.msra.mxu0 0.0
    %77 = vmatpush.msra.mxu0 0.0
    %78 = vmatpush.msra.mxu0 0.0
    %79 = vmatpush.msra.mxu0 %v62
    %80 = vmatmul.f32.gmra.mxu0 %v58
    %v81 = vpop.f32.mrf.mxu0
    %v82 = vadd.f32 %v55, %v81
    %83 = vdwg.mxu0
    %v84 = vmax.f32 %v82, 0.0
    %v85 = vpack.c.bf16 %v84, %v84
    %v86 = vld [vmem:[#allocation2] sm:$0xf]
    %v87 = vld [vmem:[#allocation2 + $0x4] sm:$0xf]
    %v88 = vld [vmem:[#allocation2 + $0x8] sm:$0xf]
    %v89 = vld [vmem:[#allocation2 + $0xc] sm:$0xf]
    %v90 = vld [vmem:[#allocation2 + $0x10] sm:$0xf]
    %v91 = vld [vmem:[#allocation2 + $0x14] sm:$0xf]
    %v92 = vld [vmem:[#allocation2 + $0x18] sm:$0xf]
    %v93 = vld [vmem:[#allocation2 + $0x1c] sm:$0xf]
    %v94 = vld [vmem:[#allocation2 + $0x20] sm:$0xf]
    %v95 = vld [vmem:[#allocation2 + $0x24] sm:$0xf]
    %v96 = vld [vmem:[#allocation2 + $0x28] sm:$0xf]
    %v97 = vld [vmem:[#allocation2 + $0x2c] sm:$0xf]
    %v98 = vld [vmem:[#allocation2 + $0x30] sm:$0xf]
    %v99 = vld [vmem:[#allocation2 + $0x34] sm:$0xf]
    %v100 = vld [vmem:[#allocation2 + $0x38] sm:$0xf]
    %v101 = vld [vmem:[#allocation2 + $0x3c] sm:$0xf]
    %v102 = vperm.slane %v53, 1
    %v119 = vunpack.c.l.b16 %v86
    %v120 = vunpack.c.l.b16 %v87
    %v121 = vunpack.c.l.b16 %v88
    %v122 = vunpack.c.l.b16 %v89
    %v123 = vunpack.c.l.b16 %v90
    %v124 = vunpack.c.l.b16 %v91
    %v125 = vunpack.c.l.b16 %v92
    %v126 = vunpack.c.l.b16 %v93
    %v127 = vunpack.c.l.b16 %v94
    %v128 = vunpack.c.l.b16 %v95
    %v129 = vunpack.c.l.b16 %v96
    %v130 = vunpack.c.l.b16 %v97
    %v131 = vunpack.c.l.b16 %v98
    %v132 = vunpack.c.l.b16 %v99
    %v133 = vunpack.c.l.b16 %v100
    %v134 = vunpack.c.l.b16 %v101
    %v135 = vpack.c.b16 %v120, %v119
    %v136 = vpack.c.b16 %v122, %v121
    %v137 = vpack.c.b16 %v124, %v123
    %v138 = vpack.c.b16 %v126, %v125
    %v139 = vpack.c.b16 %v128, %v127
    %v140 = vpack.c.b16 %v130, %v129
    %v141 = vpack.c.b16 %v132, %v131
    %v142 = vpack.c.b16 %v134, %v133
    %151 = vmatpush.bf16.msra.mxu0 %v142
    %152 = vmatpush.bf16.msra.mxu0 %v141
    %153 = vmatpush.bf16.msra.mxu0 %v140
    %154 = vmatpush.bf16.msra.mxu0 %v139
    %155 = vmatpush.bf16.msra.mxu0 %v138
    %156 = vmatpush.bf16.msra.mxu0 %v137
    %157 = vmatpush.bf16.msra.mxu0 %v136
    %158 = vmatpush.bf16.msra.mxu0 %v135
    %159 = vmatmul.bf16.gmra.mxu0 %v85
    %v160 = vpop.f32.mrf.mxu0
    %v161 = vadd.f32 %v102, %v160
    %v162 = vpop.f32.mrf.mxu0
    %163 = vdwg.mxu0
    %v164 = vmax.f32 %v161, 0.0
    %v165 = vpack.c.bf16 %v164, %v164
    %v166 = vld [vmem:[#allocation4] sm:$0xf]
    %v167 = vld [vmem:[#allocation4 + $0x4] sm:$0xf]
    %v168 = vld [vmem:[#allocation4 + $0x8] sm:$0xf]
    %v169 = vld [vmem:[#allocation4 + $0xc] sm:$0xf]
    %v170 = vld [vmem:[#allocation4 + $0x10] sm:$0xf]
    %v171 = vld [vmem:[#allocation4 + $0x14] sm:$0xf]
    %v172 = vld [vmem:[#allocation4 + $0x18] sm:$0xf]
    %v173 = vld [vmem:[#allocation4 + $0x1c] sm:$0xf]
    %v174 = vld [vmem:[#allocation4 + $0x20] sm:$0xf]
    %v175 = vld [vmem:[#allocation4 + $0x24] sm:$0xf]
    %v176 = vld [vmem:[#allocation4 + $0x28] sm:$0xf]
    %v177 = vld [vmem:[#allocation4 + $0x2c] sm:$0xf]
    %v178 = vld [vmem:[#allocation4 + $0x30] sm:$0xf]
    %v179 = vld [vmem:[#allocation4 + $0x34] sm:$0xf]
    %v180 = vld [vmem:[#allocation4 + $0x38] sm:$0xf]
    %v181 = vld [vmem:[#allocation4 + $0x3c] sm:$0xf]
    %v182 = vperm.slane %v53, 2
    %v199 = vunpack.c.l.b16 %v166
    %v200 = vunpack.c.l.b16 %v167
    %v201 = vunpack.c.l.b16 %v168
    %v202 = vunpack.c.l.b16 %v169
    %v203 = vunpack.c.l.b16 %v170
    %v204 = vunpack.c.l.b16 %v171
    %v205 = vunpack.c.l.b16 %v172
    %v206 = vunpack.c.l.b16 %v173
    %v207 = vunpack.c.l.b16 %v174
    %v208 = vunpack.c.l.b16 %v175
    %v209 = vunpack.c.l.b16 %v176
    %v210 = vunpack.c.l.b16 %v177
    %v211 = vunpack.c.l.b16 %v178
    %v212 = vunpack.c.l.b16 %v179
    %v213 = vunpack.c.l.b16 %v180
    %v214 = vunpack.c.l.b16 %v181
    %v215 = vpack.c.b16 %v200, %v199
    %v216 = vpack.c.b16 %v202, %v201
    %v217 = vpack.c.b16 %v204, %v203
    %v218 = vpack.c.b16 %v206, %v205
    %v219 = vpack.c.b16 %v208, %v207
    %v220 = vpack.c.b16 %v210, %v209
    %v221 = vpack.c.b16 %v212, %v211
    %v222 = vpack.c.b16 %v214, %v213
    %231 = vmatpush.bf16.msra.mxu0 %v222
    %232 = vmatpush.bf16.msra.mxu0 %v221
    %233 = vmatpush.bf16.msra.mxu0 %v220
    %234 = vmatpush.bf16.msra.mxu0 %v219
    %235 = vmatpush.bf16.msra.mxu0 %v218
    %236 = vmatpush.bf16.msra.mxu0 %v217
    %237 = vmatpush.bf16.msra.mxu0 %v216
    %238 = vmatpush.bf16.msra.mxu0 %v215
    %239 = vmatmul.bf16.gmra.mxu0 %v165
    %v240 = vpop.f32.mrf.mxu0
    %v241 = vadd.f32 %v182, %v240
    %v242 = vpop.f32.mrf.mxu0
    %243 = vdwg.mxu0
    %vm244 = vcmask 15360
    %245 = vst.msk [vmem:[%s5] sm:$0xff] %vm244, %v241
    // Predicated region
    $region30: #{tpu_custom_call.1} parent=1 // pred_check
      _
    $region31: #{tpu_custom_call.1} parent=1 // pred_check_branch
      %247 = sbr.rel (0) target = $region33
    $region32: #{tpu_custom_call.1} parent=1 // pred_region
      _
    $region33: #{tpu_custom_call.1} parent=1 // pred_fallthru
      _
    // Predicated region
    $region34: #{tpu_custom_call.1} parent=1 // pred_check
      _
    $region35: #{tpu_custom_call.1} parent=1 // pred_check_branch
      %249 = sbr.rel (0) target = $region37
    $region36: #{tpu_custom_call.1} parent=1 // pred_region
      _
    $region37: #{tpu_custom_call.1} parent=1 // pred_fallthru
      _
    %250 = vsyncpa [#allocation3], 1
    %251 = vsyncpa [#allocation5], 1

</llo_original>
